<compile_context>
chip_gen: v5e
topology: v5e:2x2
jax: 0.10.0
libtpu: 0.0.40
codegen_flags: <defaults>
</compile_context>

<pallas_src>
import functools

import jax
import jax.numpy as jnp
from jax.experimental import pallas as pl
from jax.experimental.pallas import tpu as pltpu


def _iqln_kernel(x_ref, g_ref, b_ref, o_ref, *, eps, inv_d):
    """x_ref/o_ref: (Nb, D, Ts) VMEM; g_ref/b_ref: (1, D, 1) VMEM (resident, loaded once).

    LayerNorm over D (= C*Q) independently for every (batch, spatial) position,
    one-pass moments in f32.
    """
    x = x_ref[...].astype(jnp.float32)                     # (Nb, D, Ts), lane-dense last axis
    s1 = jnp.sum(x, axis=1, keepdims=True)                 # (Nb, 1, Ts)  XLU sublane reduce
    s2 = jnp.sum(x * x, axis=1, keepdims=True)             # (Nb, 1, Ts)
    mean = s1 * inv_d
    var = jnp.maximum(s2 * inv_d - mean * mean, 0.0)       # biased var; clamp vs. cancellation
    inv = jax.lax.rsqrt(var + eps)                         # EUP slot (free next to VPU work)
    y = (x - mean) * inv * g_ref[...] + b_ref[...]         # (1,D,1) broadcasts over Nb / lanes
    o_ref[...] = y.astype(o_ref.dtype)


def _vmem_limit_bytes():
    """Half of physical VMEM: 32 MiB on v7x (64 MiB VMEM), 64 MiB on v5e/v6e (128 MiB)."""
    try:
        cap = pltpu.get_tpu_info().vmem_capacity_bytes
    except Exception:  # pragma: no cover - conservative fallback
        cap = 128 * 1024 * 1024
    return min(cap // 2, 64 * 1024 * 1024)


def iqln_pallas(x, gamma, beta, eps=1e-5):
    """x: (B, C, Q, H, W); gamma, beta: (C*Q,).  Returns (B, C, Q, H, W)."""
    B, C, Q, H, W = x.shape
    D = C * Q
    S = H * W
    assert gamma.shape == (D,) and beta.shape == (D,)

    # Pure reshape (no transpose): (B, C, Q, H, W) -> (B, D, S).  d = c*Q+q matches the
    # LayerNorm feature index of the PyTorch reshape, s = h*W+w the spatial index.
    xr = x.reshape(B, D, S)
    itemsize = jnp.dtype(x.dtype).itemsize

    # ---- element budget per block (dtype- and chip-aware) -------------------------------
    # Live VMEM per block element: in + out double-buffered in x.dtype (4*itemsize) plus
    # roughly two full f32 temporaries inside the body (8 bytes).  Keep the total at about
    # half of the scoped VMEM limit.
    vmem_limit = _vmem_limit_bytes()
    bytes_per_elem = 4 * itemsize + 8
    max_block_elems = max((vmem_limit // 2) // bytes_per_elem, D * 128)

    # ---- spatial tile: prefer one contiguous full-S slab, else 128-multiple sub-tiles ----
    if D * S <= max_block_elems or S % 128 != 0:
        ts = S
    else:
        ts = 128
        while (ts * 2 <= S and S % (ts * 2) == 0
               and D * (ts * 2) <= max_block_elems):
            ts *= 2

    # ---- batch block: amortize the ~0.35us/step overhead within the same budget ----------
    nb = 1
    while (nb * 2 <= B and B % (nb * 2) == 0
           and nb * 2 * D * ts <= max_block_elems):
        nb *= 2

    # Keep >= 2 grid steps so v7x's two TensorCores both get work and the software pipeline
    # has a next block to prefetch; shrink the batch block first, then the spatial tile.
    while nb > 1 and (B // nb) * (S // ts) < 2:
        nb //= 2
    if ((B // nb) * (S // ts) < 2 and S % 128 == 0 and ts >= 256
            and (ts // 2) % 128 == 0):
        ts //= 2
    # TODO(synk): if a profile shows "parallel" semantics not sharding across v7x TCs,
    # add a leading size-2 CORE_PARALLEL grid axis.

    grid = (B // nb, S // ts)

    g3 = gamma.reshape(1, D, 1).astype(jnp.float32)
    b3 = beta.reshape(1, D, 1).astype(jnp.float32)

    kern = functools.partial(_iqln_kernel, eps=float(eps), inv_d=float(1.0 / D))
    out = pl.pallas_call(
        kern,
        out_shape=jax.ShapeDtypeStruct((B, D, S), x.dtype),
        grid_spec=pltpu.PrefetchScalarGridSpec(
            num_scalar_prefetch=0,
            grid=grid,
            in_specs=[
                pl.BlockSpec((nb, D, ts), lambda b, s: (b, 0, s)),
                pl.BlockSpec((1, D, 1), lambda b, s: (0, 0, 0)),
                pl.BlockSpec((1, D, 1), lambda b, s: (0, 0, 0)),
            ],
            out_specs=pl.BlockSpec((nb, D, ts), lambda b, s: (b, 0, s)),
        ),
        compiler_params=pltpu.CompilerParams(
            dimension_semantics=("parallel", "parallel"),
            vmem_limit_bytes=vmem_limit),
    )(xr, g3, b3)

    return out.reshape(B, C, Q, H, W)


def iqln_ref(x, gamma, beta, eps=1e-5):
    """Pure-JAX reference matching the PyTorch IQLN forward (permute -> LN -> permute)."""
    B, C, Q, H, W = x.shape
    xr = jnp.transpose(x, (0, 3, 4, 1, 2)).reshape(B, H * W, C * Q)
    mean = jnp.mean(xr, axis=-1, keepdims=True)
    var = jnp.mean(jnp.square(xr - mean), axis=-1, keepdims=True)
    y = (xr - mean) * jax.lax.rsqrt(var + eps) * gamma + beta
    return jnp.transpose(y.reshape(B, H, W, C, Q), (0, 3, 4, 1, 2))


if __name__ == "__main__":
    B, C, Q, H, W = 2, 4, 8, 16, 16          # num_features = C*Q = 32
    D = C * Q

    key = jax.random.PRNGKey(0)
    k1, k2, k3 = jax.random.split(key, 3)
    x = jax.random.normal(k1, (B, C, Q, H, W), jnp.float32)
    # elementwise_affine=True: weight/bias over the normalized (C*Q) features
    gamma = 1.0 + 0.1 * jax.random.normal(k2, (D,), jnp.float32)
    beta = 0.1 * jax.random.normal(k3, (D,), jnp.float32)

    out = jax.block_until_ready(iqln_pallas(x, gamma, beta, eps=1e-5))

    ref = iqln_ref(x, gamma, beta, eps=1e-5)
    err = float(jnp.max(jnp.abs(out - ref)))
    assert jnp.allclose(out, ref, atol=1e-4, rtol=1e-4), f"max abs err {err}"

    print("KERNEL_OK")
</pallas_src>

<mosaic_0001>
module attributes {stable_mosaic.version = 11 : i64} {
  func.func @_iqln_kernel(%arg0: i32, %arg1: i32, %arg2: memref<1x32x256xf32, #tpu.memory_space<vmem>>, %arg3: memref<1x32x1xf32, #tpu.memory_space<vmem>>, %arg4: memref<1x32x1xf32, #tpu.memory_space<vmem>>, %arg5: memref<1x32x256xf32, #tpu.memory_space<vmem>>) attributes {dimension_semantics = [#tpu.dimension_semantics<parallel>, #tpu.dimension_semantics<parallel>], iteration_bounds = array<i64: 2, 1>, scalar_prefetch = 0 : i64, scratch_operands = 0 : i64, tpu.core_type = #tpu.core_type<tc>, window_params = [{transform_indices = @transform_0, window_bounds = array<i64: 1, 32, 256>}, {pipeline_mode = #tpu.pipeline_mode<synchronous>, transform_indices = @transform_1, window_bounds = array<i64: 1, 32, 1>}, {pipeline_mode = #tpu.pipeline_mode<synchronous>, transform_indices = @transform_2, window_bounds = array<i64: 1, 32, 1>}, {transform_indices = @transform_3, window_bounds = array<i64: 1, 32, 256>}]} {
    %c0 = arith.constant 0 : index
    %c0_0 = arith.constant 0 : index
    %c0_1 = arith.constant 0 : index
    %0 = vector.load %arg2[%c0, %c0_0, %c0_1] : memref<1x32x256xf32, #tpu.memory_space<vmem>>, vector<1x32x256xf32>
    %cst = arith.constant dense<0.000000e+00> : vector<1x256xf32>
    %1 = vector.multi_reduction <add>, %0, %cst [1] : vector<1x32x256xf32> to vector<1x256xf32>
    %2 = vector.shape_cast %1 : vector<1x256xf32> to vector<1x1x256xf32>
    %3 = arith.mulf %0, %0 : vector<1x32x256xf32>
    %cst_2 = arith.constant dense<0.000000e+00> : vector<1x256xf32>
    %4 = vector.multi_reduction <add>, %3, %cst_2 [1] : vector<1x32x256xf32> to vector<1x256xf32>
    %5 = vector.shape_cast %4 : vector<1x256xf32> to vector<1x1x256xf32>
    %cst_3 = arith.constant 3.125000e-02 : f32
    %6 = vector.broadcast %cst_3 : f32 to vector<1x1x256xf32>
    %7 = arith.mulf %2, %6 : vector<1x1x256xf32>
    %cst_4 = arith.constant 3.125000e-02 : f32
    %8 = vector.broadcast %cst_4 : f32 to vector<1x1x256xf32>
    %9 = arith.mulf %5, %8 : vector<1x1x256xf32>
    %10 = arith.mulf %7, %7 : vector<1x1x256xf32>
    %11 = arith.subf %9, %10 : vector<1x1x256xf32>
    %cst_5 = arith.constant 0.000000e+00 : f32
    %12 = vector.broadcast %cst_5 : f32 to vector<1x1x256xf32>
    %13 = arith.maximumf %11, %12 : vector<1x1x256xf32>
    %cst_6 = arith.constant 9.99999974E-6 : f32
    %14 = vector.broadcast %cst_6 : f32 to vector<1x1x256xf32>
    %15 = arith.addf %13, %14 : vector<1x1x256xf32>
    %16 = math.rsqrt %15 : vector<1x1x256xf32>
    %17 = vector.broadcast %7 : vector<1x1x256xf32> to vector<1x32x256xf32>
    %18 = arith.subf %0, %17 : vector<1x32x256xf32>
    %19 = vector.broadcast %16 : vector<1x1x256xf32> to vector<1x32x256xf32>
    %20 = arith.mulf %18, %19 : vector<1x32x256xf32>
    %c0_7 = arith.constant 0 : index
    %c0_8 = arith.constant 0 : index
    %c0_9 = arith.constant 0 : index
    %21 = vector.load %arg3[%c0_7, %c0_8, %c0_9] : memref<1x32x1xf32, #tpu.memory_space<vmem>>, vector<1x32x1xf32>
    %22 = vector.broadcast %21 : vector<1x32x1xf32> to vector<1x32x256xf32>
    %23 = arith.mulf %20, %22 : vector<1x32x256xf32>
    %c0_10 = arith.constant 0 : index
    %c0_11 = arith.constant 0 : index
    %c0_12 = arith.constant 0 : index
    %24 = vector.load %arg4[%c0_10, %c0_11, %c0_12] : memref<1x32x1xf32, #tpu.memory_space<vmem>>, vector<1x32x1xf32>
    %25 = vector.broadcast %24 : vector<1x32x1xf32> to vector<1x32x256xf32>
    %26 = arith.addf %23, %25 : vector<1x32x256xf32>
    %c0_13 = arith.constant 0 : index
    %c0_14 = arith.constant 0 : index
    %c0_15 = arith.constant 0 : index
    %27 = vector.load %arg5[%c0_13, %c0_14, %c0_15] : memref<1x32x256xf32, #tpu.memory_space<vmem>>, vector<1x32x256xf32>
    tpu.vector_store %arg5[%c0_13, %c0_14, %c0_15], %26 {strides = array<i32>} : memref<1x32x256xf32, #tpu.memory_space<vmem>>, vector<1x32x256xf32>,
    return
  }
  func.func @transform_0(%arg0: i32, %arg1: i32) -> (i32, i32, i32) {
    %c0_i32 = arith.constant 0 : i32
    %c0_i32_0 = arith.constant 0 : i32
    return %arg0, %c0_i32, %arg1 : i32, i32, i32
  }
  func.func @transform_1(%arg0: i32, %arg1: i32) -> (i32, i32, i32) {
    %c0_i32 = arith.constant 0 : i32
    %c0_i32_0 = arith.constant 0 : i32
    %c0_i32_1 = arith.constant 0 : i32
    %c0_i32_2 = arith.constant 0 : i32
    return %c0_i32, %c0_i32_0, %c0_i32_1 : i32, i32, i32
  }
  func.func @transform_2(%arg0: i32, %arg1: i32) -> (i32, i32, i32) {
    %c0_i32 = arith.constant 0 : i32
    %c0_i32_0 = arith.constant 0 : i32
    %c0_i32_1 = arith.constant 0 : i32
    %c0_i32_2 = arith.constant 0 : i32
    return %c0_i32, %c0_i32_0, %c0_i32_1 : i32, i32, i32
  }
  func.func @transform_3(%arg0: i32, %arg1: i32) -> (i32, i32, i32) {
    %c0_i32 = arith.constant 0 : i32
    %c0_i32_0 = arith.constant 0 : i32
    return %arg0, %c0_i32, %arg1 : i32, i32, i32
  }
}

</mosaic_0001>

<llo_original>
// kernel: tpu_custom_call.1
$region0: #{tpu_custom_call.1}
  #allocation0 [shape = 'u32[]', space=smem, size = 0x4, offset = 0x4, fixed_abs, tag = 'smem constant byte address 0x4 - core index']
  #allocation1 [shape = 'u32[72,128]{1,0:T(1,128)}', space=vmem, size = 0x9000, scoped, tag = 'internal scratch']
  %s0 = inlined_call_operand.hbm [shape: f32[2,32,256], index: 0, kind: input, shape index: {}]
  %s1 = inlined_call_operand.vmem [shape: f32[1,32,1], index: 1, kind: input, shape index: {}]
  %s2 = inlined_call_operand.vmem [shape: f32[1,32,1], index: 2, kind: input, shape index: {}]
  %s3 = inlined_call_operand.hbm [shape: f32[2,32,256], index: 3, kind: output, shape index: {}]
  %s4 = sld [smem:[#allocation0]]
  $region49: #{tpu_custom_call.1} parent=0
    _
  %s6 = ssub.s32 1, %s4
  %s7 = scalar_select 0, %s6, %s4
  $region1: #{tpu_custom_call.1} parent=0
    #allocation2 [shape = 'u8[65536]{0}', space=vmem, size = 0x10000, scoped, tag = 'input window, operand 0']
    #allocation3 [shape = 's32[2]{0}', space=sflag, size = 0x8, scoped, tag = 'scoped memory for tpu_custom_call.1']
    #allocation4 [shape = 's32[2]{0}', space=sflag, size = 0x8, scoped, tag = 'scoped memory for tpu_custom_call.1']
    #allocation5 [shape = 'u8[65536]{0}', space=vmem, size = 0x10000, scoped, tag = 'output window, operand 0']
    %8 = vsyncpa [#allocation3], 0
    %s9 = scalar_lea.sflag [#allocation3], 1
    %10 = vsyncpa %s9, 0
    %11 = vsyncpa [#allocation4], 0
    %s12 = scalar_lea.sflag [#allocation4], 1
    %13 = vsyncpa %s12, 0
    loop: start=0, step=1, limit=4
    $region2: #{tpu_custom_call.1} parent=1 // loop_pre_header
      _
    $region3: #{tpu_custom_call.1} parent=1 // loop_header
      %s15 = sphi 0, %s19
      %p16 = scmp.ge.s32.totalorder %s15, 4
      %s22 = sphi 0, %s34
      %s23 = sphi 0, %s30
      %s24 = sphi 0, %s22
      %s25 = sphi 0, %s23
      %s26 = sphi 0, %s24
      %s27 = sphi 0, %s25
      %s39 = sphi 0, %s41
      %s42 = sphi 0, %s39
      %s43 = sphi 0, %s42
      %s59 = sphi 0, %s43
      %s63 = sphi 0, %s63
      %s65 = sphi 0, %s63
      %s66 = sphi 0, %s65
      %s80 = sphi 0, %s66
      %s84 = sphi 0, %s84
      %s86 = sphi 0, %s84
      %s87 = sphi 0, %s86
      %s101 = sphi 0, %s87
      %s109 = sphi 0, %s111
      %s112 = sphi 0, %s109
      %s113 = sphi 0, %s112
      %s129 = sphi 0, %s113
    $region4: #{tpu_custom_call.1} parent=1 // loop_header_branch
      %18 = sbr.rel (%p16) target = $region8
    $region5: #{tpu_custom_call.1} parent=1 // loop_body
      %s20 = ssub.s32 %s15, 1
      %s21 = ssub.s32 %s15, 2
      %s28 = sadd.s32 1, %s23
      %p29 = scmp.ge.s32.totalorder %s28, 1
      %s30 = scalar_select %p29, 0, %s28
      %s31 = sadd.s32 1, %s22
      %s32 = scalar_select %p29, %s31, %s22
      %p33 = scmp.ge.s32.totalorder %s32, 2
      %s34 = scalar_select %p33, 0, %s32
      %s35 = ssub.s32 %s22, %s34
      %s36 = ssub.s32 %s23, %s30
      %s37 = sor.u32 %s35, %s36
      %p38 = scmp.eq.s32.totalorder %s37, 0
      %s40 = sadd.s32 %s39, 1
      %s41 = scalar_select %p38, %s39, %s40
      %p44 = pneg %p38
      %p45 = scmp.eq.s32.totalorder %s15, 1
      %p46 = por %p44, %p45
      %p47 = scmp.ne.s32.totalorder %s39, %s42
      %p48 = scmp.eq.s32.totalorder %s15, 0
      %p49 = por %p47, %p48
      %p50 = scmp.ne.s32.totalorder %s39, %s42
      %p51 = scmp.eq.s32.totalorder %s20, 1
      %p52 = por %p50, %p51
      %p53 = scmp.ne.s32.totalorder %s42, %s43
      %p54 = scmp.eq.s32.totalorder %s20, 0
      %p55 = por %p53, %p54
      %p56 = scmp.ne.s32.totalorder %s42, %s43
      %p57 = scmp.eq.s32.totalorder %s21, 1
      %p58 = por %p56, %p57
      %p60 = scmp.ne.s32.totalorder %s43, %s59
      %p61 = scmp.eq.s32.totalorder %s21, 0
      %p62 = por %p60, %p61
      %s64 = sadd.s32 %s63, 1
      %p67 = scmp.eq.s32.totalorder %s15, 1
      %p68 = scmp.ne.s32.totalorder %s63, %s65
      %p69 = scmp.eq.s32.totalorder %s15, 0
      %p70 = por %p68, %p69
      %p71 = scmp.ne.s32.totalorder %s63, %s65
      %p72 = scmp.eq.s32.totalorder %s20, 1
      %p73 = por %p71, %p72
      %p74 = scmp.ne.s32.totalorder %s65, %s66
      %p75 = scmp.eq.s32.totalorder %s20, 0
      %p76 = por %p74, %p75
      %p77 = scmp.ne.s32.totalorder %s65, %s66
      %p78 = scmp.eq.s32.totalorder %s21, 1
      %p79 = por %p77, %p78
      %p81 = scmp.ne.s32.totalorder %s66, %s80
      %p82 = scmp.eq.s32.totalorder %s21, 0
      %p83 = por %p81, %p82
      %s85 = sadd.s32 %s84, 1
      %p88 = scmp.eq.s32.totalorder %s15, 1
      %p89 = scmp.ne.s32.totalorder %s84, %s86
      %p90 = scmp.eq.s32.totalorder %s15, 0
      %p91 = por %p89, %p90
      %p92 = scmp.ne.s32.totalorder %s84, %s86
      %p93 = scmp.eq.s32.totalorder %s20, 1
      %p94 = por %p92, %p93
      %p95 = scmp.ne.s32.totalorder %s86, %s87
      %p96 = scmp.eq.s32.totalorder %s20, 0
      %p97 = por %p95, %p96
      %p98 = scmp.ne.s32.totalorder %s86, %s87
      %p99 = scmp.eq.s32.totalorder %s21, 1
      %p100 = por %p98, %p99
      %p102 = scmp.ne.s32.totalorder %s87, %s101
      %p103 = scmp.eq.s32.totalorder %s21, 0
      %p104 = por %p102, %p103
      %s105 = ssub.s32 %s22, %s34
      %s106 = ssub.s32 %s23, %s30
      %s107 = sor.u32 %s105, %s106
      %p108 = scmp.eq.s32.totalorder %s107, 0
      %s110 = sadd.s32 %s109, 1
      %s111 = scalar_select %p108, %s109, %s110
      %p114 = pneg %p108
      %p115 = scmp.eq.s32.totalorder %s15, 1
      %p116 = por %p114, %p115
      %p117 = scmp.ne.s32.totalorder %s109, %s112
      %p118 = scmp.eq.s32.totalorder %s15, 0
      %p119 = por %p117, %p118
      %p120 = scmp.ne.s32.totalorder %s109, %s112
      %p121 = scmp.eq.s32.totalorder %s20, 1
      %p122 = por %p120, %p121
      %p123 = scmp.ne.s32.totalorder %s112, %s113
      %p124 = scmp.eq.s32.totalorder %s20, 0
      %p125 = por %p123, %p124
      %p126 = scmp.ne.s32.totalorder %s112, %s113
      %p127 = scmp.eq.s32.totalorder %s21, 1
      %p128 = por %p126, %p127
      %p130 = scmp.ne.s32.totalorder %s113, %s129
      %p131 = scmp.eq.s32.totalorder %s21, 0
      %p132 = por %p130, %p131
      %p133 = scmp.le.s32.totalorder 1, %s15
      %p134 = scmp.lt.s32.totalorder %s15, 3
      %p135 = pnand %p133, %p134
      %p136 = pneg %p135
      // Predicated region
      $region9: #{tpu_custom_call.1} parent=5 // pred_check
        _
      $region10: #{tpu_custom_call.1} parent=5 // pred_check_branch
        %138 = sbr.rel (%p135) target = $region12
      $region11: #{tpu_custom_call.1} parent=5 // pred_region
        %s139 = ssub.s32 %s15, 1
        // Predicated region
        $region13: #{tpu_custom_call.1} parent=11 // pred_check
          %p140 = pneg %p76
        $region14: #{tpu_custom_call.1} parent=11 // pred_check_branch
          %142 = sbr.rel (%p140) target = $region16
        $region15: #{tpu_custom_call.1} parent=11 // pred_region
          _
        $region16: #{tpu_custom_call.1} parent=11 // pred_fallthru
          _
        // Predicated region
        $region17: #{tpu_custom_call.1} parent=11 // pred_check
          %p143 = pneg %p97
        $region18: #{tpu_custom_call.1} parent=11 // pred_check_branch
          %145 = sbr.rel (%p143) target = $region20
        $region19: #{tpu_custom_call.1} parent=11 // pred_region
          _
        $region20: #{tpu_custom_call.1} parent=11 // pred_fallthru
          _
      $region12: #{tpu_custom_call.1} parent=5 // pred_fallthru
        _
      %p146 = scmp.lt.s32.totalorder %s15, 2
      // Predicated region
      $region21: #{tpu_custom_call.1} parent=5 // pred_check
        %p147 = pneg %p146
      $region22: #{tpu_custom_call.1} parent=5 // pred_check_branch
        %149 = sbr.rel (%p147) target = $region24
      $region23: #{tpu_custom_call.1} parent=5 // pred_region
        // Predicated region
        $region25: #{tpu_custom_call.1} parent=23 // pred_check
          %p150 = pneg %p49
        $region26: #{tpu_custom_call.1} parent=23 // pred_check_branch
          %152 = sbr.rel (%p150) target = $region28
        $region27: #{tpu_custom_call.1} parent=23 // pred_region
          %s153 = sand.u32 %s39, 1
          %s154 = scalar_lea.sflag [#allocation3], %s153
          %s155 = sand.u32 %s39, 1
          %s156 = smul.addr %s155, 64
          %s157 = scalar_lea.vmem [#allocation2], %s156
          %s158 = smul.u32 2, %s23
          %160 = vsyncadd %s154, 0
          %s161 = smul.addr %s22, 8
          %s162 = sadd.s32 %s158, %s161
          %s163 = smul.addr %s162, 8
          %s164 = scalar_lea.hbm %s0, %s163
          %s165 = sshll.u32 %s164, 4
          %s166 = int_to_ptr.hbm [resolvable:$true] %s165
          %s167 = sshll.u32 %s157, 4
          %s168 = int_to_ptr.vmem [resolvable:$true] %s167
          %173 = dma.hbm_to_vmem [thread:$0]  %s166, 1024, %s168, %s154, 256, 256, 16
        $region28: #{tpu_custom_call.1} parent=23 // pred_fallthru
          _
      $region24: #{tpu_custom_call.1} parent=5 // pred_fallthru
        _
      %p174 = scmp.le.s32.totalorder 1, %s15
      %p175 = scmp.lt.s32.totalorder %s15, 3
      %p176 = pnand %p174, %p175
      %p177 = pneg %p176
      // Predicated region
      $region29: #{tpu_custom_call.1} parent=5 // pred_check
        _
      $region30: #{tpu_custom_call.1} parent=5 // pred_check_branch
        %179 = sbr.rel (%p176) target = $region32
      $region31: #{tpu_custom_call.1} parent=5 // pred_region
        %s180 = ssub.s32 %s15, 1
        %s181 = sand.u32 %s42, 1
        %s182 = scalar_lea.sflag [#allocation3], %s181
        %s183 = sand.u32 %s42, 1
        %s184 = smul.addr %s183, 64
        %s185 = scalar_lea.vmem [#allocation2], %s184
        // Predicated region
        $region33: #{tpu_custom_call.1} parent=31 // pred_check
          %p186 = pneg %p55
        $region34: #{tpu_custom_call.1} parent=31 // pred_check_branch
          %188 = sbr.rel (%p186) target = $region36
        $region35: #{tpu_custom_call.1} parent=31 // pred_region
          %190 = dma.done %s182, 1024
        $region36: #{tpu_custom_call.1} parent=31 // pred_fallthru
          _
        %s191 = sand.u32 %s42, 1
        %s192 = scalar_lea.sflag [#allocation3], %s191
        %s193 = sand.u32 %s42, 1
        %s194 = smul.addr %s193, 64
        %s195 = scalar_lea.vmem [#allocation2], %s194
        %p196 = pneg %p55
        %p197 = pneg %p52
        %p198 = pneg %p76
        %p199 = pneg %p73
        %p200 = pneg %p97
        %p201 = pneg %p94
        %p202 = pneg %p125
        %p203 = pneg %p122
        %s204 = sand.u32 %s112, 1
        %s205 = scalar_lea.sflag [#allocation4], %s204
        %s206 = sand.u32 %s112, 1
        %s207 = smul.addr %s206, 64
        %s208 = scalar_lea.vmem [#allocation5], %s207
        %s209 = smul.u32 2, %s25
        %s210 = smul.u32 2, %s25
        %v211 = vld [vmem:[%s185] sm:$0xff]
        %v212 = vld [vmem:[%s185 + $0x8] sm:$0xff]
        %v213 = vld [vmem:[%s185 + $0x10] sm:$0xff]
        %v214 = vld [vmem:[%s185 + $0x18] sm:$0xff]
        %v215 = vld [vmem:[%s185 + $0x20] sm:$0xff]
        %v216 = vld [vmem:[%s185 + $0x28] sm:$0xff]
        %v217 = vld [vmem:[%s185 + $0x30] sm:$0xff]
        %v218 = vld [vmem:[%s185 + $0x38] sm:$0xff]
        %v219 = vadd.f32 %v211, %v213
        %v220 = vadd.f32 %v219, %v215
        %v221 = vadd.f32 %v220, %v217
        %v222 = vrot.slane %v221, 4
        %v223 = vadd.f32 %v221, %v222
        %v224 = vrot.slane %v223, 2
        %v225 = vadd.f32 %v223, %v224
        %v226 = vrot.slane %v225, 1
        %v227 = vadd.f32 %v225, %v226
        %v228 = vadd.f32 %v212, %v214
        %v229 = vadd.f32 %v228, %v216
        %v230 = vadd.f32 %v229, %v218
        %v231 = vrot.slane %v230, 4
        %v232 = vadd.f32 %v230, %v231
        %v233 = vrot.slane %v232, 2
        %v234 = vadd.f32 %v232, %v233
        %v235 = vrot.slane %v234, 1
        %v236 = vadd.f32 %v234, %v235
        %v237 = vmul.f32 %v211, %v211
        %v238 = vmul.f32 %v212, %v212
        %v239 = vmul.f32 %v213, %v213
        %v240 = vmul.f32 %v214, %v214
        %v241 = vmul.f32 %v215, %v215
        %v242 = vmul.f32 %v216, %v216
        %v243 = vmul.f32 %v217, %v217
        %v244 = vmul.f32 %v218, %v218
        %v245 = vadd.f32 %v237, %v239
        %v246 = vadd.f32 %v245, %v241
        %v247 = vadd.f32 %v246, %v243
        %v248 = vrot.slane %v247, 4
        %v249 = vadd.f32 %v247, %v248
        %v250 = vrot.slane %v249, 2
        %v251 = vadd.f32 %v249, %v250
        %v252 = vrot.slane %v251, 1
        %v253 = vadd.f32 %v251, %v252
        %v254 = vadd.f32 %v238, %v240
        %v255 = vadd.f32 %v254, %v242
        %v256 = vadd.f32 %v255, %v244
        %v257 = vrot.slane %v256, 4
        %v258 = vadd.f32 %v256, %v257
        %v259 = vrot.slane %v258, 2
        %v260 = vadd.f32 %v258, %v259
        %v261 = vrot.slane %v260, 1
        %v262 = vadd.f32 %v260, %v261
        %v263 = vmul.f32 %v227, 0.03125
        %v264 = vmul.f32 %v236, 0.03125
        %v265 = vmul.f32 %v253, 0.03125
        %v266 = vmul.f32 %v262, 0.03125
        %v267 = vmul.f32 %v263, %v263
        %v268 = vmul.f32 %v264, %v264
        %v269 = vsub.f32 %v265, %v267
        %v270 = vsub.f32 %v266, %v268
        %v271 = vmax.f32 %v269, 0.0
        %v272 = vmax.f32 %v270, 0.0
        %v273 = vadd.f32 %v271, 1e-05
        %v274 = vadd.f32 %v272, 1e-05
        %v275 = vrsqrt.pop %v273
        %v276 = vmul.f32 %v275, %v273
        %v277 = vmul.f32 %v276, %v275
        %v278 = vmul.f32 0.5, %v277
        %v279 = vsub.f32 1.5, %v278
        %v280 = vmul.f32 %v275, %v279
        %vm281 = vweird.f32 %v273
        %vm282 = vweird.f32 %v275
        %vm283 = vmor %vm281, %vm282
        %v284 = vsel %vm283, %v275, %v280
        %v285 = vrsqrt.pop %v274
        %v286 = vmul.f32 %v285, %v274
        %v287 = vmul.f32 %v286, %v285
        %v288 = vmul.f32 0.5, %v287
        %v289 = vsub.f32 1.5, %v288
        %v290 = vmul.f32 %v285, %v289
        %vm291 = vweird.f32 %v274
        %vm292 = vweird.f32 %v285
        %vm293 = vmor %vm291, %vm292
        %v294 = vsel %vm293, %v285, %v290
        %v295 = vsub.f32 %v211, %v263
        %v296 = vsub.f32 %v212, %v264
        %v297 = vsub.f32 %v213, %v263
        %v298 = vsub.f32 %v214, %v264
        %v299 = vsub.f32 %v215, %v263
        %v300 = vsub.f32 %v216, %v264
        %v301 = vsub.f32 %v217, %v263
        %v302 = vsub.f32 %v218, %v264
        %v303 = vmul.f32 %v295, %v284
        %v304 = vmul.f32 %v296, %v294
        %v305 = vmul.f32 %v297, %v284
        %v306 = vmul.f32 %v298, %v294
        %v307 = vmul.f32 %v299, %v284
        %v308 = vmul.f32 %v300, %v294
        %v309 = vmul.f32 %v301, %v284
        %v310 = vmul.f32 %v302, %v294
        %v311 = vld [vmem:[%s1] sm:$0xff]
        %v312 = vld [vmem:[%s1 + $0x8] sm:$0xff]
        %v313 = vld [vmem:[%s1 + $0x10] sm:$0xff]
        %v314 = vld [vmem:[%s1 + $0x18] sm:$0xff]
        %316 = vset.pattern.permute.xlu0 0
        %317 = vperm.xlu0 %316, %v311
        %v318 = vpop.permute.xlu0 %317
        %321 = vset.pattern.permute.xlu0 0
        %322 = vperm.xlu0 %321, %v312
        %v323 = vpop.permute.xlu0 %322
        %326 = vset.pattern.permute.xlu0 0
        %327 = vperm.xlu0 %326, %v313
        %v328 = vpop.permute.xlu0 %327
        %331 = vset.pattern.permute.xlu0 0
        %332 = vperm.xlu0 %331, %v314
        %v333 = vpop.permute.xlu0 %332
        %v335 = vmul.f32 %v303, %v318
        %v336 = vmul.f32 %v304, %v318
        %v337 = vmul.f32 %v305, %v323
        %v338 = vmul.f32 %v306, %v323
        %v339 = vmul.f32 %v307, %v328
        %v340 = vmul.f32 %v308, %v328
        %v341 = vmul.f32 %v309, %v333
        %v342 = vmul.f32 %v310, %v333
        %v343 = vld [vmem:[%s2] sm:$0xff]
        %v344 = vld [vmem:[%s2 + $0x8] sm:$0xff]
        %v345 = vld [vmem:[%s2 + $0x10] sm:$0xff]
        %v346 = vld [vmem:[%s2 + $0x18] sm:$0xff]
        %348 = vset.pattern.permute.xlu0 0
        %349 = vperm.xlu0 %348, %v343
        %v350 = vpop.permute.xlu0 %349
        %353 = vset.pattern.permute.xlu0 0
        %354 = vperm.xlu0 %353, %v344
        %v355 = vpop.permute.xlu0 %354
        %358 = vset.pattern.permute.xlu0 0
        %359 = vperm.xlu0 %358, %v345
        %v360 = vpop.permute.xlu0 %359
        %363 = vset.pattern.permute.xlu0 0
        %364 = vperm.xlu0 %363, %v346
        %v365 = vpop.permute.xlu0 %364
        %v367 = vadd.f32 %v335, %v350
        %v368 = vadd.f32 %v336, %v350
        %v369 = vadd.f32 %v337, %v355
        %v370 = vadd.f32 %v338, %v355
        %v371 = vadd.f32 %v339, %v360
        %v372 = vadd.f32 %v340, %v360
        %v373 = vadd.f32 %v341, %v365
        %v374 = vadd.f32 %v342, %v365
        %375 = vst [vmem:[%s208] sm:$0xff] %v367
        %376 = vst [vmem:[%s208 + $0x8] sm:$0xff] %v368
        %377 = vst [vmem:[%s208 + $0x10] sm:$0xff] %v369
        %378 = vst [vmem:[%s208 + $0x18] sm:$0xff] %v370
        %379 = vst [vmem:[%s208 + $0x20] sm:$0xff] %v371
        %380 = vst [vmem:[%s208 + $0x28] sm:$0xff] %v372
        %381 = vst [vmem:[%s208 + $0x30] sm:$0xff] %v373
        %382 = vst [vmem:[%s208 + $0x38] sm:$0xff] %v374
        %s383 = sand.u32 %s112, 1
        %s384 = scalar_lea.sflag [#allocation4], %s383
        %s385 = sand.u32 %s112, 1
        %s386 = smul.addr %s385, 64
        %s387 = scalar_lea.vmem [#allocation5], %s386
        // Predicated region
        $region37: #{tpu_custom_call.1} parent=31 // pred_check
          %p388 = pneg %p122
        $region38: #{tpu_custom_call.1} parent=31 // pred_check_branch
          %390 = sbr.rel (%p388) target = $region40
        $region39: #{tpu_custom_call.1} parent=31 // pred_region
          %s391 = smul.u32 2, %s25
          %393 = vsyncadd %s384, 0
          %s394 = smul.addr %s24, 8
          %s395 = sadd.s32 %s391, %s394
          %s396 = smul.addr %s395, 8
          %s397 = scalar_lea.hbm %s3, %s396
          %s398 = sshll.u32 %s387, 4
          %s399 = int_to_ptr.vmem [resolvable:$true] %s398
          %s400 = sshll.u32 %s397, 4
          %s401 = int_to_ptr.hbm [resolvable:$true] %s400
          %406 = dma.vmem_to_hbm [thread:$0]  %s399, 1024, %s401, %s384, 256, 256, 16
        $region40: #{tpu_custom_call.1} parent=31 // pred_fallthru
          _
      $region32: #{tpu_custom_call.1} parent=5 // pred_fallthru
        _
      %p407 = scmp.le.s32.totalorder 2, %s15
      // Predicated region
      $region41: #{tpu_custom_call.1} parent=5 // pred_check
        %p408 = pneg %p407
      $region42: #{tpu_custom_call.1} parent=5 // pred_check_branch
        %410 = sbr.rel (%p408) target = $region44
      $region43: #{tpu_custom_call.1} parent=5 // pred_region
        %s411 = ssub.s32 %s15, 2
        // Predicated region
        $region45: #{tpu_custom_call.1} parent=43 // pred_check
          %p412 = pneg %p128
        $region46: #{tpu_custom_call.1} parent=43 // pred_check_branch
          %414 = sbr.rel (%p412) target = $region48
        $region47: #{tpu_custom_call.1} parent=43 // pred_region
          %s415 = sand.u32 %s113, 1
          %s416 = scalar_lea.sflag [#allocation4], %s415
          %s417 = sand.u32 %s113, 1
          %s418 = smul.addr %s417, 64
          %s419 = scalar_lea.vmem [#allocation5], %s418
          %421 = dma.done %s416, 1024
        $region48: #{tpu_custom_call.1} parent=43 // pred_fallthru
          _
      $region44: #{tpu_custom_call.1} parent=5 // pred_fallthru
        _
    $region6: #{tpu_custom_call.1} parent=1 // loop_footer
      %s19 = sadd.s32 1, %s15
    $region7: #{tpu_custom_call.1} parent=1 // loop_footer_branch
      %14 = sbr.rel target = $region3
    $region8: #{tpu_custom_call.1} parent=1 // loop_exit
      _
    %422 = vsyncpa [#allocation3], 1
    %s423 = scalar_lea.sflag [#allocation3], 1
    %424 = vsyncpa %s423, 1
    %425 = vsyncpa [#allocation4], 1
    %s426 = scalar_lea.sflag [#allocation4], 1
    %427 = vsyncpa %s426, 1

</llo_original>
